<compile_context>
chip_gen: v7x
topology: tpu7x:2x2x1
jax: 0.10.0
libtpu: 0.0.40
codegen_flags: <defaults>
</compile_context>

<pallas_src>
import functools

import jax
import jax.numpy as jnp
from jax.experimental import pallas as pl
from jax.experimental.pallas import tpu as pltpu

LANES = 128  # TPU lane width; row-group size for the lane repack.


def _fuse_kernel(x_ref, w_ref, o_ref):
    # x_ref: (tg, LANES*F) packed rows; w_ref: (LANES*F, LANES) segmented
    # weight; o_ref: (tg, LANES) lane-dense fused scalars.  MXU reduce with
    # f32 accumulation, cast back to the input dtype on store.
    o_ref[...] = jnp.dot(
        x_ref[...], w_ref[...], preferred_element_type=jnp.float32
    ).astype(o_ref.dtype)


@functools.partial(jax.jit, static_argnames=("tg",))
def fuse_head_forward(x, w_row, *, tg=1024):
    """FuseHead forward. x: (..., F); w_row: (1, F) torch Linear weight layout.

    Returns (..., 1), matching `x @ w_row.T`.
    """
    lead = x.shape[:-1]
    F = x.shape[-1]
    M = 1
    for d in lead:
        M *= d
    x2d = x.reshape(M, F)

    # Lane repack: (M, F) -> (G, 128*F).  Metadata-only when M % 128 == 0;
    # otherwise pad the row count to the next multiple of 128 (only case in
    # which any HBM copy of x is made).
    mp = pl.cdiv(M, LANES) * LANES
    if mp != M:
        x2d = jnp.pad(x2d, ((0, mp - M), (0, 0)))
    G = mp // LANES
    xp = x2d.reshape(G, LANES * F)

    # Segmented weight: W_pack[a*F + f, b] = w[f] if a == b else 0.
    w_vec = w_row.reshape(F).astype(jnp.float32)
    w_pack = (w_vec[None, :, None] * jnp.eye(LANES, dtype=jnp.float32)[:, None, :])
    w_pack = w_pack.reshape(LANES * F, LANES).astype(x.dtype)

    # Tile the group axis.  Block second-minor dim must be a multiple of 8 or
    # equal to the full extent; the ragged final block is handled by Pallas.
    tg = int(min(tg, G))
    tg = max(tg, 1)
    if tg < G and tg % 8 != 0:
        tg = max(8, (tg // 8) * 8)
    grid = (pl.cdiv(G, tg),)

    itemsize = jnp.dtype(x.dtype).itemsize
    w_bytes = LANES * F * LANES * itemsize
    vmem_bytes = (
        2 * tg * LANES * F * itemsize   # double-buffered packed input
        + 2 * tg * LANES * itemsize     # double-buffered lane-dense output
        + 2 * w_bytes                   # resident weight
        + (2 << 20)                     # slack
    )
    cost = pl.CostEstimate(
        flops=2 * M * F,
        transcendentals=0,
        bytes_accessed=M * F * itemsize + M * itemsize + w_bytes,
    )

    outp = pl.pallas_call(
        _fuse_kernel,
        out_shape=jax.ShapeDtypeStruct((G, LANES), x.dtype),
        grid_spec=pl.GridSpec(
            grid=grid,
            in_specs=[
                # x: tile the group axis; last dim (128*F) is fully lane-dense.
                pl.BlockSpec((tg, LANES * F), lambda i: (i, 0)),
                # weight: constant index_map -> DMA'd once, stays resident.
                pl.BlockSpec((LANES * F, LANES), lambda i: (0, 0)),
            ],
            out_specs=pl.BlockSpec((tg, LANES), lambda i: (i, 0)),
        ),
        compiler_params=pltpu.CompilerParams(
            dimension_semantics=("parallel",),
            vmem_limit_bytes=int(vmem_bytes),
        ),
        cost_estimate=cost,
    )(xp, w_pack)

    out = outp.reshape(mp)
    if mp != M:
        out = out[:M]
    return out.reshape(*lead, 1)


def make_fuse_head_params(image_size: int, patch_size: int, dtype=jnp.float32):
    """Deterministic init matching FuseHead.init_tensors():
       weight = constant 1 / in_features, torch layout (1, in_features)."""
    num_patches = (image_size // patch_size) ** 2
    in_features = 1 + num_patches
    return jnp.full((1, in_features), 1.0 / in_features, dtype=dtype)


if __name__ == "__main__":
    # Small config: image_size=16, patch_size=4 -> num_patches=16, in_features=17
    image_size, patch_size = 16, 4
    num_patches = (image_size // patch_size) ** 2
    in_features = 1 + num_patches

    w_row = make_fuse_head_params(image_size, patch_size)  # (1, 17)

    key = jax.random.PRNGKey(0)
    # x: (batch=2, seq=8, 1 + num_patches=17)
    x = jax.random.normal(key, (2, 8, in_features), dtype=jnp.float32)

    out = fuse_head_forward(x, w_row)
    out = jax.block_until_ready(out)

    # Exact f32 elementwise reference (torch: x @ weight.T).  The in-kernel
    # f32 MXU matmul is emulated with multi-pass bf16; allow a slightly
    # looser-than-f32 tolerance for that emulation.
    ref = jnp.sum(x * w_row[0], axis=-1, keepdims=True)
    assert out.shape == (2, 8, 1), out.shape
    assert jnp.allclose(out, ref, atol=1e-4, rtol=1e-4), float(
        jnp.max(jnp.abs(out - ref))
    )

    print("KERNEL_OK")
</pallas_src>

<mosaic_0001>
module attributes {stable_mosaic.version = 11 : i64} {
  func.func @_fuse_kernel(%arg0: i32, %arg1: memref<1x2176xf32, #tpu.memory_space<vmem>>, %arg2: memref<2176x128xf32, #tpu.memory_space<vmem>>, %arg3: memref<1x128xf32, #tpu.memory_space<vmem>>) attributes {dimension_semantics = [#tpu.dimension_semantics<parallel>], iteration_bounds = array<i64: 1>, scalar_prefetch = 0 : i64, scratch_operands = 0 : i64, tpu.core_type = #tpu.core_type<tc>, window_params = [{transform_indices = @transform_0, window_bounds = array<i64: 1, 2176>}, {pipeline_mode = #tpu.pipeline_mode<synchronous>, transform_indices = @transform_1, window_bounds = array<i64: 2176, 128>}, {transform_indices = @transform_2, window_bounds = array<i64: 1, 128>}]} {
    %c0 = arith.constant 0 : index
    %c0_0 = arith.constant 0 : index
    %0 = vector.load %arg1[%c0, %c0_0] : memref<1x2176xf32, #tpu.memory_space<vmem>>, vector<1x2176xf32>
    %c0_1 = arith.constant 0 : index
    %c0_2 = arith.constant 0 : index
    %1 = vector.load %arg2[%c0_1, %c0_2] : memref<2176x128xf32, #tpu.memory_space<vmem>>, vector<2176x128xf32>
    %cst = arith.constant dense<0.000000e+00> : vector<1x128xf32>
    %2 = tpu.matmul %0, %1, %cst {dimension_numbers = #tpu.dot_dimension_numbers<[1], [0], [0], [1], [0, 0, 1, 1], [], []>} : vector<1x2176xf32>, vector<2176x128xf32>, vector<1x128xf32> -> vector<1x128xf32>
    %c0_3 = arith.constant 0 : index
    %c0_4 = arith.constant 0 : index
    %3 = vector.load %arg3[%c0_3, %c0_4] : memref<1x128xf32, #tpu.memory_space<vmem>>, vector<1x128xf32>
    tpu.vector_store %arg3[%c0_3, %c0_4], %2 {strides = array<i32>} : memref<1x128xf32, #tpu.memory_space<vmem>>, vector<1x128xf32>,
    return
  }
  func.func @transform_0(%arg0: i32) -> (i32, i32) {
    %c0_i32 = arith.constant 0 : i32
    %c0_i32_0 = arith.constant 0 : i32
    return %arg0, %c0_i32 : i32, i32
  }
  func.func @transform_1(%arg0: i32) -> (i32, i32) {
    %c0_i32 = arith.constant 0 : i32
    %c0_i32_0 = arith.constant 0 : i32
    %c0_i32_1 = arith.constant 0 : i32
    return %c0_i32, %c0_i32_0 : i32, i32
  }
  func.func @transform_2(%arg0: i32) -> (i32, i32) {
    %c0_i32 = arith.constant 0 : i32
    %c0_i32_0 = arith.constant 0 : i32
    return %arg0, %c0_i32 : i32, i32
  }
}

</mosaic_0001>

<llo_original>
// kernel: fuse_head_forward.1
$region0: #{fuse_head_forward.1}
  #allocation0 [shape = 'u32[]', space=smem, size = 0x4, offset = 0x4, fixed_abs, tag = 'smem constant byte address 0x4 - core index']
  #allocation1 [shape = 'u32[144,128]{1,0:T(1,128)}', space=vmem, size = 0x12000, scoped, tag = 'internal scratch']
  %s0 = inlined_call_operand.vmem [shape: f32[1,2176], index: 0, kind: input, shape index: {}]
  %s1 = inlined_call_operand.vmem [shape: f32[2176,128], index: 1, kind: input, shape index: {}]
  %s2 = inlined_call_operand.vmem [shape: f32[1,128], index: 2, kind: output, shape index: {}]
  %s3 = sld [smem:[#allocation0]]
  $region18: #{fuse_head_forward.1} parent=0
    _
  %s5 = ssub.s32 1, %s3
  %s6 = scalar_select 0, %s5, %s3
  // Predicated region
  $region2: #{fuse_head_forward.1} parent=0 // pred_check
    _
  $region3: #{fuse_head_forward.1} parent=0 // pred_check_branch
    %8 = sbr.rel (0) target = $region5
  $region4: #{fuse_head_forward.1} parent=0 // pred_region
    _
  $region5: #{fuse_head_forward.1} parent=0 // pred_fallthru
    _
  // Predicated region
  $region6: #{fuse_head_forward.1} parent=0 // pred_check
    _
  $region7: #{fuse_head_forward.1} parent=0 // pred_check_branch
    %10 = sbr.rel (0) target = $region9
  $region8: #{fuse_head_forward.1} parent=0 // pred_region
    _
  $region9: #{fuse_head_forward.1} parent=0 // pred_fallthru
    _
  %v11 = vld [vmem:[%s0] sm:$0xff]
  %v12 = vld [vmem:[%s0 + $0x8] sm:$0xff]
  %v13 = vld [vmem:[%s0 + $0x10] sm:$0x1]
  %v14 = vld [vmem:[%s1] sm:$0xff]
  %v15 = vld [vmem:[%s1 + $0x8] sm:$0xff]
  %v16 = vld [vmem:[%s1 + $0x10] sm:$0xff]
  %v17 = vld [vmem:[%s1 + $0x18] sm:$0xff]
  %v18 = vld [vmem:[%s1 + $0x20] sm:$0xff]
  %v19 = vld [vmem:[%s1 + $0x28] sm:$0xff]
  %v20 = vld [vmem:[%s1 + $0x30] sm:$0xff]
  %v21 = vld [vmem:[%s1 + $0x38] sm:$0xff]
  %v22 = vld [vmem:[%s1 + $0x40] sm:$0xff]
  %v23 = vld [vmem:[%s1 + $0x48] sm:$0xff]
  %v24 = vld [vmem:[%s1 + $0x50] sm:$0xff]
  %v25 = vld [vmem:[%s1 + $0x58] sm:$0xff]
  %v26 = vld [vmem:[%s1 + $0x60] sm:$0xff]
  %v27 = vld [vmem:[%s1 + $0x68] sm:$0xff]
  %v28 = vld [vmem:[%s1 + $0x70] sm:$0xff]
  %v29 = vld [vmem:[%s1 + $0x78] sm:$0xff]
  %v30 = vld [vmem:[%s1 + $0x80] sm:$0xff]
  %v31 = vld [vmem:[%s1 + $0x88] sm:$0xff]
  %v32 = vld [vmem:[%s1 + $0x90] sm:$0xff]
  %v33 = vld [vmem:[%s1 + $0x98] sm:$0xff]
  %v34 = vld [vmem:[%s1 + $0xa0] sm:$0xff]
  %v35 = vld [vmem:[%s1 + $0xa8] sm:$0xff]
  %v36 = vld [vmem:[%s1 + $0xb0] sm:$0xff]
  %v37 = vld [vmem:[%s1 + $0xb8] sm:$0xff]
  %v38 = vld [vmem:[%s1 + $0xc0] sm:$0xff]
  %v39 = vld [vmem:[%s1 + $0xc8] sm:$0xff]
  %v40 = vld [vmem:[%s1 + $0xd0] sm:$0xff]
  %v41 = vld [vmem:[%s1 + $0xd8] sm:$0xff]
  %v42 = vld [vmem:[%s1 + $0xe0] sm:$0xff]
  %v43 = vld [vmem:[%s1 + $0xe8] sm:$0xff]
  %v44 = vld [vmem:[%s1 + $0xf0] sm:$0xff]
  %v45 = vld [vmem:[%s1 + $0xf8] sm:$0xff]
  %v46 = vld [vmem:[%s1 + $0x100] sm:$0xff]
  %v47 = vld [vmem:[%s1 + $0x108] sm:$0xff]
  %v48 = vld [vmem:[%s1 + $0x110] sm:$0xff]
  %v49 = vld [vmem:[%s1 + $0x118] sm:$0xff]
  %v50 = vld [vmem:[%s1 + $0x120] sm:$0xff]
  %v51 = vld [vmem:[%s1 + $0x128] sm:$0xff]
  %v52 = vld [vmem:[%s1 + $0x130] sm:$0xff]
  %v53 = vld [vmem:[%s1 + $0x138] sm:$0xff]
  %v54 = vld [vmem:[%s1 + $0x140] sm:$0xff]
  %v55 = vld [vmem:[%s1 + $0x148] sm:$0xff]
  %v56 = vld [vmem:[%s1 + $0x150] sm:$0xff]
  %v57 = vld [vmem:[%s1 + $0x158] sm:$0xff]
  %v58 = vld [vmem:[%s1 + $0x160] sm:$0xff]
  %v59 = vld [vmem:[%s1 + $0x168] sm:$0xff]
  %v60 = vld [vmem:[%s1 + $0x170] sm:$0xff]
  %v61 = vld [vmem:[%s1 + $0x178] sm:$0xff]
  %v62 = vld [vmem:[%s1 + $0x180] sm:$0xff]
  %v63 = vld [vmem:[%s1 + $0x188] sm:$0xff]
  %v64 = vld [vmem:[%s1 + $0x190] sm:$0xff]
  %v65 = vld [vmem:[%s1 + $0x198] sm:$0xff]
  %v66 = vld [vmem:[%s1 + $0x1a0] sm:$0xff]
  %v67 = vld [vmem:[%s1 + $0x1a8] sm:$0xff]
  %v68 = vld [vmem:[%s1 + $0x1b0] sm:$0xff]
  %v69 = vld [vmem:[%s1 + $0x1b8] sm:$0xff]
  %v70 = vld [vmem:[%s1 + $0x1c0] sm:$0xff]
  %v71 = vld [vmem:[%s1 + $0x1c8] sm:$0xff]
  %v72 = vld [vmem:[%s1 + $0x1d0] sm:$0xff]
  %v73 = vld [vmem:[%s1 + $0x1d8] sm:$0xff]
  %v74 = vld [vmem:[%s1 + $0x1e0] sm:$0xff]
  %v75 = vld [vmem:[%s1 + $0x1e8] sm:$0xff]
  %v76 = vld [vmem:[%s1 + $0x1f0] sm:$0xff]
  %v77 = vld [vmem:[%s1 + $0x1f8] sm:$0xff]
  %v78 = vld [vmem:[%s1 + $0x200] sm:$0xff]
  %v79 = vld [vmem:[%s1 + $0x208] sm:$0xff]
  %v80 = vld [vmem:[%s1 + $0x210] sm:$0xff]
  %v81 = vld [vmem:[%s1 + $0x218] sm:$0xff]
  %v82 = vld [vmem:[%s1 + $0x220] sm:$0xff]
  %v83 = vld [vmem:[%s1 + $0x228] sm:$0xff]
  %v84 = vld [vmem:[%s1 + $0x230] sm:$0xff]
  %v85 = vld [vmem:[%s1 + $0x238] sm:$0xff]
  %v86 = vld [vmem:[%s1 + $0x240] sm:$0xff]
  %v87 = vld [vmem:[%s1 + $0x248] sm:$0xff]
  %v88 = vld [vmem:[%s1 + $0x250] sm:$0xff]
  %v89 = vld [vmem:[%s1 + $0x258] sm:$0xff]
  %v90 = vld [vmem:[%s1 + $0x260] sm:$0xff]
  %v91 = vld [vmem:[%s1 + $0x268] sm:$0xff]
  %v92 = vld [vmem:[%s1 + $0x270] sm:$0xff]
  %v93 = vld [vmem:[%s1 + $0x278] sm:$0xff]
  %v94 = vld [vmem:[%s1 + $0x280] sm:$0xff]
  %v95 = vld [vmem:[%s1 + $0x288] sm:$0xff]
  %v96 = vld [vmem:[%s1 + $0x290] sm:$0xff]
  %v97 = vld [vmem:[%s1 + $0x298] sm:$0xff]
  %v98 = vld [vmem:[%s1 + $0x2a0] sm:$0xff]
  %v99 = vld [vmem:[%s1 + $0x2a8] sm:$0xff]
  %v100 = vld [vmem:[%s1 + $0x2b0] sm:$0xff]
  %v101 = vld [vmem:[%s1 + $0x2b8] sm:$0xff]
  %v102 = vld [vmem:[%s1 + $0x2c0] sm:$0xff]
  %v103 = vld [vmem:[%s1 + $0x2c8] sm:$0xff]
  %v104 = vld [vmem:[%s1 + $0x2d0] sm:$0xff]
  %v105 = vld [vmem:[%s1 + $0x2d8] sm:$0xff]
  %v106 = vld [vmem:[%s1 + $0x2e0] sm:$0xff]
  %v107 = vld [vmem:[%s1 + $0x2e8] sm:$0xff]
  %v108 = vld [vmem:[%s1 + $0x2f0] sm:$0xff]
  %v109 = vld [vmem:[%s1 + $0x2f8] sm:$0xff]
  %v110 = vld [vmem:[%s1 + $0x300] sm:$0xff]
  %v111 = vld [vmem:[%s1 + $0x308] sm:$0xff]
  %v112 = vld [vmem:[%s1 + $0x310] sm:$0xff]
  %v113 = vld [vmem:[%s1 + $0x318] sm:$0xff]
  %v114 = vld [vmem:[%s1 + $0x320] sm:$0xff]
  %v115 = vld [vmem:[%s1 + $0x328] sm:$0xff]
  %v116 = vld [vmem:[%s1 + $0x330] sm:$0xff]
  %v117 = vld [vmem:[%s1 + $0x338] sm:$0xff]
  %v118 = vld [vmem:[%s1 + $0x340] sm:$0xff]
  %v119 = vld [vmem:[%s1 + $0x348] sm:$0xff]
  %v120 = vld [vmem:[%s1 + $0x350] sm:$0xff]
  %v121 = vld [vmem:[%s1 + $0x358] sm:$0xff]
  %v122 = vld [vmem:[%s1 + $0x360] sm:$0xff]
  %v123 = vld [vmem:[%s1 + $0x368] sm:$0xff]
  %v124 = vld [vmem:[%s1 + $0x370] sm:$0xff]
  %v125 = vld [vmem:[%s1 + $0x378] sm:$0xff]
  %v126 = vld [vmem:[%s1 + $0x380] sm:$0xff]
  %v127 = vld [vmem:[%s1 + $0x388] sm:$0xff]
  %v128 = vld [vmem:[%s1 + $0x390] sm:$0xff]
  %v129 = vld [vmem:[%s1 + $0x398] sm:$0xff]
  %v130 = vld [vmem:[%s1 + $0x3a0] sm:$0xff]
  %v131 = vld [vmem:[%s1 + $0x3a8] sm:$0xff]
  %v132 = vld [vmem:[%s1 + $0x3b0] sm:$0xff]
  %v133 = vld [vmem:[%s1 + $0x3b8] sm:$0xff]
  %v134 = vld [vmem:[%s1 + $0x3c0] sm:$0xff]
  %v135 = vld [vmem:[%s1 + $0x3c8] sm:$0xff]
  %v136 = vld [vmem:[%s1 + $0x3d0] sm:$0xff]
  %v137 = vld [vmem:[%s1 + $0x3d8] sm:$0xff]
  %v138 = vld [vmem:[%s1 + $0x3e0] sm:$0xff]
  %v139 = vld [vmem:[%s1 + $0x3e8] sm:$0xff]
  %v140 = vld [vmem:[%s1 + $0x3f0] sm:$0xff]
  %v141 = vld [vmem:[%s1 + $0x3f8] sm:$0xff]
  %v142 = vld [vmem:[%s1 + $0x400] sm:$0xff]
  %v143 = vld [vmem:[%s1 + $0x408] sm:$0xff]
  %v144 = vld [vmem:[%s1 + $0x410] sm:$0xff]
  %v145 = vld [vmem:[%s1 + $0x418] sm:$0xff]
  %v146 = vld [vmem:[%s1 + $0x420] sm:$0xff]
  %v147 = vld [vmem:[%s1 + $0x428] sm:$0xff]
  %v148 = vld [vmem:[%s1 + $0x430] sm:$0xff]
  %v149 = vld [vmem:[%s1 + $0x438] sm:$0xff]
  %v150 = vld [vmem:[%s1 + $0x440] sm:$0xff]
  %v151 = vld [vmem:[%s1 + $0x448] sm:$0xff]
  %v152 = vld [vmem:[%s1 + $0x450] sm:$0xff]
  %v153 = vld [vmem:[%s1 + $0x458] sm:$0xff]
  %v154 = vld [vmem:[%s1 + $0x460] sm:$0xff]
  %v155 = vld [vmem:[%s1 + $0x468] sm:$0xff]
  %v156 = vld [vmem:[%s1 + $0x470] sm:$0xff]
  %v157 = vld [vmem:[%s1 + $0x478] sm:$0xff]
  %v158 = vld [vmem:[%s1 + $0x480] sm:$0xff]
  %v159 = vld [vmem:[%s1 + $0x488] sm:$0xff]
  %v160 = vld [vmem:[%s1 + $0x490] sm:$0xff]
  %v161 = vld [vmem:[%s1 + $0x498] sm:$0xff]
  %v162 = vld [vmem:[%s1 + $0x4a0] sm:$0xff]
  %v163 = vld [vmem:[%s1 + $0x4a8] sm:$0xff]
  %v164 = vld [vmem:[%s1 + $0x4b0] sm:$0xff]
  %v165 = vld [vmem:[%s1 + $0x4b8] sm:$0xff]
  %v166 = vld [vmem:[%s1 + $0x4c0] sm:$0xff]
  %v167 = vld [vmem:[%s1 + $0x4c8] sm:$0xff]
  %v168 = vld [vmem:[%s1 + $0x4d0] sm:$0xff]
  %v169 = vld [vmem:[%s1 + $0x4d8] sm:$0xff]
  %v170 = vld [vmem:[%s1 + $0x4e0] sm:$0xff]
  %v171 = vld [vmem:[%s1 + $0x4e8] sm:$0xff]
  %v172 = vld [vmem:[%s1 + $0x4f0] sm:$0xff]
  %v173 = vld [vmem:[%s1 + $0x4f8] sm:$0xff]
  %v174 = vld [vmem:[%s1 + $0x500] sm:$0xff]
  %v175 = vld [vmem:[%s1 + $0x508] sm:$0xff]
  %v176 = vld [vmem:[%s1 + $0x510] sm:$0xff]
  %v177 = vld [vmem:[%s1 + $0x518] sm:$0xff]
  %v178 = vld [vmem:[%s1 + $0x520] sm:$0xff]
  %v179 = vld [vmem:[%s1 + $0x528] sm:$0xff]
  %v180 = vld [vmem:[%s1 + $0x530] sm:$0xff]
  %v181 = vld [vmem:[%s1 + $0x538] sm:$0xff]
  %v182 = vld [vmem:[%s1 + $0x540] sm:$0xff]
  %v183 = vld [vmem:[%s1 + $0x548] sm:$0xff]
  %v184 = vld [vmem:[%s1 + $0x550] sm:$0xff]
  %v185 = vld [vmem:[%s1 + $0x558] sm:$0xff]
  %v186 = vld [vmem:[%s1 + $0x560] sm:$0xff]
  %v187 = vld [vmem:[%s1 + $0x568] sm:$0xff]
  %v188 = vld [vmem:[%s1 + $0x570] sm:$0xff]
  %v189 = vld [vmem:[%s1 + $0x578] sm:$0xff]
  %v190 = vld [vmem:[%s1 + $0x580] sm:$0xff]
  %v191 = vld [vmem:[%s1 + $0x588] sm:$0xff]
  %v192 = vld [vmem:[%s1 + $0x590] sm:$0xff]
  %v193 = vld [vmem:[%s1 + $0x598] sm:$0xff]
  %v194 = vld [vmem:[%s1 + $0x5a0] sm:$0xff]
  %v195 = vld [vmem:[%s1 + $0x5a8] sm:$0xff]
  %v196 = vld [vmem:[%s1 + $0x5b0] sm:$0xff]
  %v197 = vld [vmem:[%s1 + $0x5b8] sm:$0xff]
  %v198 = vld [vmem:[%s1 + $0x5c0] sm:$0xff]
  %v199 = vld [vmem:[%s1 + $0x5c8] sm:$0xff]
  %v200 = vld [vmem:[%s1 + $0x5d0] sm:$0xff]
  %v201 = vld [vmem:[%s1 + $0x5d8] sm:$0xff]
  %v202 = vld [vmem:[%s1 + $0x5e0] sm:$0xff]
  %v203 = vld [vmem:[%s1 + $0x5e8] sm:$0xff]
  %v204 = vld [vmem:[%s1 + $0x5f0] sm:$0xff]
  %v205 = vld [vmem:[%s1 + $0x5f8] sm:$0xff]
  %v206 = vld [vmem:[%s1 + $0x600] sm:$0xff]
  %v207 = vld [vmem:[%s1 + $0x608] sm:$0xff]
  %v208 = vld [vmem:[%s1 + $0x610] sm:$0xff]
  %v209 = vld [vmem:[%s1 + $0x618] sm:$0xff]
  %v210 = vld [vmem:[%s1 + $0x620] sm:$0xff]
  %v211 = vld [vmem:[%s1 + $0x628] sm:$0xff]
  %v212 = vld [vmem:[%s1 + $0x630] sm:$0xff]
  %v213 = vld [vmem:[%s1 + $0x638] sm:$0xff]
  %v214 = vld [vmem:[%s1 + $0x640] sm:$0xff]
  %v215 = vld [vmem:[%s1 + $0x648] sm:$0xff]
  %v216 = vld [vmem:[%s1 + $0x650] sm:$0xff]
  %v217 = vld [vmem:[%s1 + $0x658] sm:$0xff]
  %v218 = vld [vmem:[%s1 + $0x660] sm:$0xff]
  %v219 = vld [vmem:[%s1 + $0x668] sm:$0xff]
  %v220 = vld [vmem:[%s1 + $0x670] sm:$0xff]
  %v221 = vld [vmem:[%s1 + $0x678] sm:$0xff]
  %v222 = vld [vmem:[%s1 + $0x680] sm:$0xff]
  %v223 = vld [vmem:[%s1 + $0x688] sm:$0xff]
  %v224 = vld [vmem:[%s1 + $0x690] sm:$0xff]
  %v225 = vld [vmem:[%s1 + $0x698] sm:$0xff]
  %v226 = vld [vmem:[%s1 + $0x6a0] sm:$0xff]
  %v227 = vld [vmem:[%s1 + $0x6a8] sm:$0xff]
  %v228 = vld [vmem:[%s1 + $0x6b0] sm:$0xff]
  %v229 = vld [vmem:[%s1 + $0x6b8] sm:$0xff]
  %v230 = vld [vmem:[%s1 + $0x6c0] sm:$0xff]
  %v231 = vld [vmem:[%s1 + $0x6c8] sm:$0xff]
  %v232 = vld [vmem:[%s1 + $0x6d0] sm:$0xff]
  %v233 = vld [vmem:[%s1 + $0x6d8] sm:$0xff]
  %v234 = vld [vmem:[%s1 + $0x6e0] sm:$0xff]
  %v235 = vld [vmem:[%s1 + $0x6e8] sm:$0xff]
  %v236 = vld [vmem:[%s1 + $0x6f0] sm:$0xff]
  %v237 = vld [vmem:[%s1 + $0x6f8] sm:$0xff]
  %v238 = vld [vmem:[%s1 + $0x700] sm:$0xff]
  %v239 = vld [vmem:[%s1 + $0x708] sm:$0xff]
  %v240 = vld [vmem:[%s1 + $0x710] sm:$0xff]
  %v241 = vld [vmem:[%s1 + $0x718] sm:$0xff]
  %v242 = vld [vmem:[%s1 + $0x720] sm:$0xff]
  %v243 = vld [vmem:[%s1 + $0x728] sm:$0xff]
  %v244 = vld [vmem:[%s1 + $0x730] sm:$0xff]
  %v245 = vld [vmem:[%s1 + $0x738] sm:$0xff]
  %v246 = vld [vmem:[%s1 + $0x740] sm:$0xff]
  %v247 = vld [vmem:[%s1 + $0x748] sm:$0xff]
  %v248 = vld [vmem:[%s1 + $0x750] sm:$0xff]
  %v249 = vld [vmem:[%s1 + $0x758] sm:$0xff]
  %v250 = vld [vmem:[%s1 + $0x760] sm:$0xff]
  %v251 = vld [vmem:[%s1 + $0x768] sm:$0xff]
  %v252 = vld [vmem:[%s1 + $0x770] sm:$0xff]
  %v253 = vld [vmem:[%s1 + $0x778] sm:$0xff]
  %v254 = vld [vmem:[%s1 + $0x780] sm:$0xff]
  %v255 = vld [vmem:[%s1 + $0x788] sm:$0xff]
  %v256 = vld [vmem:[%s1 + $0x790] sm:$0xff]
  %v257 = vld [vmem:[%s1 + $0x798] sm:$0xff]
  %v258 = vld [vmem:[%s1 + $0x7a0] sm:$0xff]
  %v259 = vld [vmem:[%s1 + $0x7a8] sm:$0xff]
  %v260 = vld [vmem:[%s1 + $0x7b0] sm:$0xff]
  %v261 = vld [vmem:[%s1 + $0x7b8] sm:$0xff]
  %v262 = vld [vmem:[%s1 + $0x7c0] sm:$0xff]
  %v263 = vld [vmem:[%s1 + $0x7c8] sm:$0xff]
  %v264 = vld [vmem:[%s1 + $0x7d0] sm:$0xff]
  %v265 = vld [vmem:[%s1 + $0x7d8] sm:$0xff]
  %v266 = vld [vmem:[%s1 + $0x7e0] sm:$0xff]
  %v267 = vld [vmem:[%s1 + $0x7e8] sm:$0xff]
  %v268 = vld [vmem:[%s1 + $0x7f0] sm:$0xff]
  %v269 = vld [vmem:[%s1 + $0x7f8] sm:$0xff]
  %v270 = vld [vmem:[%s1 + $0x800] sm:$0xff]
  %v271 = vld [vmem:[%s1 + $0x808] sm:$0xff]
  %v272 = vld [vmem:[%s1 + $0x810] sm:$0xff]
  %v273 = vld [vmem:[%s1 + $0x818] sm:$0xff]
  %v274 = vld [vmem:[%s1 + $0x820] sm:$0xff]
  %v275 = vld [vmem:[%s1 + $0x828] sm:$0xff]
  %v276 = vld [vmem:[%s1 + $0x830] sm:$0xff]
  %v277 = vld [vmem:[%s1 + $0x838] sm:$0xff]
  %v278 = vld [vmem:[%s1 + $0x840] sm:$0xff]
  %v279 = vld [vmem:[%s1 + $0x848] sm:$0xff]
  %v280 = vld [vmem:[%s1 + $0x850] sm:$0xff]
  %v281 = vld [vmem:[%s1 + $0x858] sm:$0xff]
  %v282 = vld [vmem:[%s1 + $0x860] sm:$0xff]
  %v283 = vld [vmem:[%s1 + $0x868] sm:$0xff]
  %v284 = vld [vmem:[%s1 + $0x870] sm:$0xff]
  %v285 = vld [vmem:[%s1 + $0x878] sm:$0xff]
  %v289 = vlaneseq
  %v290 = vshrl.u32 %v289, 7
  %v291 = vsub.s32 0, %v290
  %v292 = vrot.slane %v11, %v291
  %v293 = vlaneseq
  %v294 = vshrl.u32 %v293, 7
  %v295 = vsub.s32 1, %v294
  %v296 = vrot.slane %v11, %v295
  %v297 = vlaneseq
  %v298 = vshrl.u32 %v297, 7
  %v299 = vsub.s32 2, %v298
  %v300 = vrot.slane %v11, %v299
  %v301 = vlaneseq
  %v302 = vshrl.u32 %v301, 7
  %v303 = vsub.s32 3, %v302
  %v304 = vrot.slane %v11, %v303
  %v305 = vlaneseq
  %v306 = vshrl.u32 %v305, 7
  %v307 = vsub.s32 4, %v306
  %v308 = vrot.slane %v11, %v307
  %v309 = vlaneseq
  %v310 = vshrl.u32 %v309, 7
  %v311 = vsub.s32 5, %v310
  %v312 = vrot.slane %v11, %v311
  %v313 = vlaneseq
  %v314 = vshrl.u32 %v313, 7
  %v315 = vsub.s32 6, %v314
  %v316 = vrot.slane %v11, %v315
  %v317 = vlaneseq
  %v318 = vshrl.u32 %v317, 7
  %v319 = vsub.s32 7, %v318
  %v320 = vrot.slane %v11, %v319
  %v321 = vlaneseq
  %v322 = vshrl.u32 %v321, 7
  %v323 = vsub.s32 0, %v322
  %v324 = vrot.slane %v12, %v323
  %v325 = vlaneseq
  %v326 = vshrl.u32 %v325, 7
  %v327 = vsub.s32 1, %v326
  %v328 = vrot.slane %v12, %v327
  %v329 = vlaneseq
  %v330 = vshrl.u32 %v329, 7
  %v331 = vsub.s32 2, %v330
  %v332 = vrot.slane %v12, %v331
  %v333 = vlaneseq
  %v334 = vshrl.u32 %v333, 7
  %v335 = vsub.s32 3, %v334
  %v336 = vrot.slane %v12, %v335
  %v337 = vlaneseq
  %v338 = vshrl.u32 %v337, 7
  %v339 = vsub.s32 4, %v338
  %v340 = vrot.slane %v12, %v339
  %v341 = vlaneseq
  %v342 = vshrl.u32 %v341, 7
  %v343 = vsub.s32 5, %v342
  %v344 = vrot.slane %v12, %v343
  %v345 = vlaneseq
  %v346 = vshrl.u32 %v345, 7
  %v347 = vsub.s32 6, %v346
  %v348 = vrot.slane %v12, %v347
  %v349 = vlaneseq
  %v350 = vshrl.u32 %v349, 7
  %v351 = vsub.s32 7, %v350
  %v352 = vrot.slane %v12, %v351
  %v353 = vlaneseq
  %v354 = vshrl.u32 %v353, 7
  %v355 = vsub.s32 0, %v354
  %v356 = vrot.slane %v13, %v355
  %374 = vmatprep.subr.mxu0 0.0
  %375 = vmatpush1.msra.mxu0 %v14
  %376 = vmatprep.subr.mxu0 0.0
  %377 = vmatpush1.msra.mxu0 %v15
  %378 = vmatprep.subr.mxu0 0.0
  %379 = vmatpush1.msra.mxu0 %v16
  %380 = vmatprep.subr.mxu0 0.0
  %381 = vmatpush1.msra.mxu0 %v17
  %382 = vmatprep.subr.mxu0 0.0
  %383 = vmatpush1.msra.mxu0 %v18
  %384 = vmatprep.subr.mxu0 0.0
  %385 = vmatpush1.msra.mxu0 %v19
  %386 = vmatprep.subr.mxu0 0.0
  %387 = vmatpush1.msra.mxu0 %v20
  %388 = vmatprep.subr.mxu0 0.0
  %389 = vmatpush1.msra.mxu0 %v21
  %390 = vmatprep.subr.mxu0 0.0
  %391 = vmatpush1.msra.mxu0 %v22
  %392 = vmatprep.subr.mxu0 0.0
  %393 = vmatpush1.msra.mxu0 %v23
  %394 = vmatprep.subr.mxu0 0.0
  %395 = vmatpush1.msra.mxu0 %v24
  %396 = vmatprep.subr.mxu0 0.0
  %397 = vmatpush1.msra.mxu0 %v25
  %398 = vmatprep.subr.mxu0 0.0
  %399 = vmatpush1.msra.mxu0 %v26
  %400 = vmatprep.subr.mxu0 0.0
  %401 = vmatpush1.msra.mxu0 %v27
  %402 = vmatprep.subr.mxu0 0.0
  %403 = vmatpush1.msra.mxu0 %v28
  %404 = vmatprep.subr.mxu0 0.0
  %405 = vmatpush1.msra.mxu0 %v29
  %406 = vmatprep.subr.mxu0 0.0
  %407 = vmatpush1.msra.mxu0 %v30
  %408 = vmatprep.subr.mxu0 0.0
  %409 = vmatpush1.msra.mxu0 %v31
  %410 = vmatprep.subr.mxu0 0.0
  %411 = vmatpush1.msra.mxu0 %v32
  %412 = vmatprep.subr.mxu0 0.0
  %413 = vmatpush1.msra.mxu0 %v33
  %414 = vmatprep.subr.mxu0 0.0
  %415 = vmatpush1.msra.mxu0 %v34
  %416 = vmatprep.subr.mxu0 0.0
  %417 = vmatpush1.msra.mxu0 %v35
  %418 = vmatprep.subr.mxu0 0.0
  %419 = vmatpush1.msra.mxu0 %v36
  %420 = vmatprep.subr.mxu0 0.0
  %421 = vmatpush1.msra.mxu0 %v37
  %422 = vmatprep.subr.mxu0 0.0
  %423 = vmatpush1.msra.mxu0 %v38
  %424 = vmatprep.subr.mxu0 0.0
  %425 = vmatpush1.msra.mxu0 %v39
  %426 = vmatprep.subr.mxu0 0.0
  %427 = vmatpush1.msra.mxu0 %v40
  %428 = vmatprep.subr.mxu0 0.0
  %429 = vmatpush1.msra.mxu0 %v41
  %430 = vmatprep.subr.mxu0 0.0
  %431 = vmatpush1.msra.mxu0 %v42
  %432 = vmatprep.subr.mxu0 0.0
  %433 = vmatpush1.msra.mxu0 %v43
  %434 = vmatprep.subr.mxu0 0.0
  %435 = vmatpush1.msra.mxu0 %v44
  %436 = vmatprep.subr.mxu0 0.0
  %437 = vmatpush1.msra.mxu0 %v45
  %438 = vmatprep.mubr.f32.mxu0 %v296
  %439 = vmatmul.mubr.f32.gmra.mrb[0].mxu0 %v292
  %v440 = vpop.f32.mrb[0].mxu0
  %v441 = vadd.f32 0.0, %v440
  %v442 = vpop.f32.mrb[0].mxu0
  %443 = vdwg.mxu0
  %444 = vmatprep.subr.mxu0 0.0
  %445 = vmatpush1.msra.mxu0 %v46
  %446 = vmatprep.subr.mxu0 0.0
  %447 = vmatpush1.msra.mxu0 %v47
  %448 = vmatprep.subr.mxu0 0.0
  %449 = vmatpush1.msra.mxu0 %v48
  %450 = vmatprep.subr.mxu0 0.0
  %451 = vmatpush1.msra.mxu0 %v49
  %452 = vmatprep.subr.mxu0 0.0
  %453 = vmatpush1.msra.mxu0 %v50
  %454 = vmatprep.subr.mxu0 0.0
  %455 = vmatpush1.msra.mxu0 %v51
  %456 = vmatprep.subr.mxu0 0.0
  %457 = vmatpush1.msra.mxu0 %v52
  %458 = vmatprep.subr.mxu0 0.0
  %459 = vmatpush1.msra.mxu0 %v53
  %460 = vmatprep.subr.mxu0 0.0
  %461 = vmatpush1.msra.mxu0 %v54
  %462 = vmatprep.subr.mxu0 0.0
  %463 = vmatpush1.msra.mxu0 %v55
  %464 = vmatprep.subr.mxu0 0.0
  %465 = vmatpush1.msra.mxu0 %v56
  %466 = vmatprep.subr.mxu0 0.0
  %467 = vmatpush1.msra.mxu0 %v57
  %468 = vmatprep.subr.mxu0 0.0
  %469 = vmatpush1.msra.mxu0 %v58
  %470 = vmatprep.subr.mxu0 0.0
  %471 = vmatpush1.msra.mxu0 %v59
  %472 = vmatprep.subr.mxu0 0.0
  %473 = vmatpush1.msra.mxu0 %v60
  %474 = vmatprep.subr.mxu0 0.0
  %475 = vmatpush1.msra.mxu0 %v61
  %476 = vmatprep.subr.mxu0 0.0
  %477 = vmatpush1.msra.mxu0 %v62
  %478 = vmatprep.subr.mxu0 0.0
  %479 = vmatpush1.msra.mxu0 %v63
  %480 = vmatprep.subr.mxu0 0.0
  %481 = vmatpush1.msra.mxu0 %v64
  %482 = vmatprep.subr.mxu0 0.0
  %483 = vmatpush1.msra.mxu0 %v65
  %484 = vmatprep.subr.mxu0 0.0
  %485 = vmatpush1.msra.mxu0 %v66
  %486 = vmatprep.subr.mxu0 0.0
  %487 = vmatpush1.msra.mxu0 %v67
  %488 = vmatprep.subr.mxu0 0.0
  %489 = vmatpush1.msra.mxu0 %v68
  %490 = vmatprep.subr.mxu0 0.0
  %491 = vmatpush1.msra.mxu0 %v69
  %492 = vmatprep.subr.mxu0 0.0
  %493 = vmatpush1.msra.mxu0 %v70
  %494 = vmatprep.subr.mxu0 0.0
  %495 = vmatpush1.msra.mxu0 %v71
  %496 = vmatprep.subr.mxu0 0.0
  %497 = vmatpush1.msra.mxu0 %v72
  %498 = vmatprep.subr.mxu0 0.0
  %499 = vmatpush1.msra.mxu0 %v73
  %500 = vmatprep.subr.mxu0 0.0
  %501 = vmatpush1.msra.mxu0 %v74
  %502 = vmatprep.subr.mxu0 0.0
  %503 = vmatpush1.msra.mxu0 %v75
  %504 = vmatprep.subr.mxu0 0.0
  %505 = vmatpush1.msra.mxu0 %v76
  %506 = vmatprep.subr.mxu0 0.0
  %507 = vmatpush1.msra.mxu0 %v77
  %508 = vmatprep.mubr.f32.mxu0 %v304
  %509 = vmatmul.mubr.f32.gmra.mrb[0].mxu0 %v300
  %v510 = vpop.f32.mrb[0].mxu0
  %v511 = vadd.f32 %v441, %v510
  %v512 = vpop.f32.mrb[0].mxu0
  %513 = vdwg.mxu0
  %514 = vmatprep.subr.mxu0 0.0
  %515 = vmatpush1.msra.mxu0 %v78
  %516 = vmatprep.subr.mxu0 0.0
  %517 = vmatpush1.msra.mxu0 %v79
  %518 = vmatprep.subr.mxu0 0.0
  %519 = vmatpush1.msra.mxu0 %v80
  %520 = vmatprep.subr.mxu0 0.0
  %521 = vmatpush1.msra.mxu0 %v81
  %522 = vmatprep.subr.mxu0 0.0
  %523 = vmatpush1.msra.mxu0 %v82
  %524 = vmatprep.subr.mxu0 0.0
  %525 = vmatpush1.msra.mxu0 %v83
  %526 = vmatprep.subr.mxu0 0.0
  %527 = vmatpush1.msra.mxu0 %v84
  %528 = vmatprep.subr.mxu0 0.0
  %529 = vmatpush1.msra.mxu0 %v85
  %530 = vmatprep.subr.mxu0 0.0
  %531 = vmatpush1.msra.mxu0 %v86
  %532 = vmatprep.subr.mxu0 0.0
  %533 = vmatpush1.msra.mxu0 %v87
  %534 = vmatprep.subr.mxu0 0.0
  %535 = vmatpush1.msra.mxu0 %v88
  %536 = vmatprep.subr.mxu0 0.0
  %537 = vmatpush1.msra.mxu0 %v89
  %538 = vmatprep.subr.mxu0 0.0
  %539 = vmatpush1.msra.mxu0 %v90
  %540 = vmatprep.subr.mxu0 0.0
  %541 = vmatpush1.msra.mxu0 %v91
  %542 = vmatprep.subr.mxu0 0.0
  %543 = vmatpush1.msra.mxu0 %v92
  %544 = vmatprep.subr.mxu0 0.0
  %545 = vmatpush1.msra.mxu0 %v93
  %546 = vmatprep.subr.mxu0 0.0
  %547 = vmatpush1.msra.mxu0 %v94
  %548 = vmatprep.subr.mxu0 0.0
  %549 = vmatpush1.msra.mxu0 %v95
  %550 = vmatprep.subr.mxu0 0.0
  %551 = vmatpush1.msra.mxu0 %v96
  %552 = vmatprep.subr.mxu0 0.0
  %553 = vmatpush1.msra.mxu0 %v97
  %554 = vmatprep.subr.mxu0 0.0
  %555 = vmatpush1.msra.mxu0 %v98
  %556 = vmatprep.subr.mxu0 0.0
  %557 = vmatpush1.msra.mxu0 %v99
  %558 = vmatprep.subr.mxu0 0.0
  %559 = vmatpush1.msra.mxu0 %v100
  %560 = vmatprep.subr.mxu0 0.0
  %561 = vmatpush1.msra.mxu0 %v101
  %562 = vmatprep.subr.mxu0 0.0
  %563 = vmatpush1.msra.mxu0 %v102
  %564 = vmatprep.subr.mxu0 0.0
  %565 = vmatpush1.msra.mxu0 %v103
  %566 = vmatprep.subr.mxu0 0.0
  %567 = vmatpush1.msra.mxu0 %v104
  %568 = vmatprep.subr.mxu0 0.0
  %569 = vmatpush1.msra.mxu0 %v105
  %570 = vmatprep.subr.mxu0 0.0
  %571 = vmatpush1.msra.mxu0 %v106
  %572 = vmatprep.subr.mxu0 0.0
  %573 = vmatpush1.msra.mxu0 %v107
  %574 = vmatprep.subr.mxu0 0.0
  %575 = vmatpush1.msra.mxu0 %v108
  %576 = vmatprep.subr.mxu0 0.0
  %577 = vmatpush1.msra.mxu0 %v109
  %578 = vmatprep.mubr.f32.mxu0 %v312
  %579 = vmatmul.mubr.f32.gmra.mrb[0].mxu0 %v308
  %v580 = vpop.f32.mrb[0].mxu0
  %v581 = vadd.f32 %v511, %v580
  %v582 = vpop.f32.mrb[0].mxu0
  %583 = vdwg.mxu0
  %584 = vmatprep.subr.mxu0 0.0
  %585 = vmatpush1.msra.mxu0 %v110
  %586 = vmatprep.subr.mxu0 0.0
  %587 = vmatpush1.msra.mxu0 %v111
  %588 = vmatprep.subr.mxu0 0.0
  %589 = vmatpush1.msra.mxu0 %v112
  %590 = vmatprep.subr.mxu0 0.0
  %591 = vmatpush1.msra.mxu0 %v113
  %592 = vmatprep.subr.mxu0 0.0
  %593 = vmatpush1.msra.mxu0 %v114
  %594 = vmatprep.subr.mxu0 0.0
  %595 = vmatpush1.msra.mxu0 %v115
  %596 = vmatprep.subr.mxu0 0.0
  %597 = vmatpush1.msra.mxu0 %v116
  %598 = vmatprep.subr.mxu0 0.0
  %599 = vmatpush1.msra.mxu0 %v117
  %600 = vmatprep.subr.mxu0 0.0
  %601 = vmatpush1.msra.mxu0 %v118
  %602 = vmatprep.subr.mxu0 0.0
  %603 = vmatpush1.msra.mxu0 %v119
  %604 = vmatprep.subr.mxu0 0.0
  %605 = vmatpush1.msra.mxu0 %v120
  %606 = vmatprep.subr.mxu0 0.0
  %607 = vmatpush1.msra.mxu0 %v121
  %608 = vmatprep.subr.mxu0 0.0
  %609 = vmatpush1.msra.mxu0 %v122
  %610 = vmatprep.subr.mxu0 0.0
  %611 = vmatpush1.msra.mxu0 %v123
  %612 = vmatprep.subr.mxu0 0.0
  %613 = vmatpush1.msra.mxu0 %v124
  %614 = vmatprep.subr.mxu0 0.0
  %615 = vmatpush1.msra.mxu0 %v125
  %616 = vmatprep.subr.mxu0 0.0
  %617 = vmatpush1.msra.mxu0 %v126
  %618 = vmatprep.subr.mxu0 0.0
  %619 = vmatpush1.msra.mxu0 %v127
  %620 = vmatprep.subr.mxu0 0.0
  %621 = vmatpush1.msra.mxu0 %v128
  %622 = vmatprep.subr.mxu0 0.0
  %623 = vmatpush1.msra.mxu0 %v129
  %624 = vmatprep.subr.mxu0 0.0
  %625 = vmatpush1.msra.mxu0 %v130
  %626 = vmatprep.subr.mxu0 0.0
  %627 = vmatpush1.msra.mxu0 %v131
  %628 = vmatprep.subr.mxu0 0.0
  %629 = vmatpush1.msra.mxu0 %v132
  %630 = vmatprep.subr.mxu0 0.0
  %631 = vmatpush1.msra.mxu0 %v133
  %632 = vmatprep.subr.mxu0 0.0
  %633 = vmatpush1.msra.mxu0 %v134
  %634 = vmatprep.subr.mxu0 0.0
  %635 = vmatpush1.msra.mxu0 %v135
  %636 = vmatprep.subr.mxu0 0.0
  %637 = vmatpush1.msra.mxu0 %v136
  %638 = vmatprep.subr.mxu0 0.0
  %639 = vmatpush1.msra.mxu0 %v137
  %640 = vmatprep.subr.mxu0 0.0
  %641 = vmatpush1.msra.mxu0 %v138
  %642 = vmatprep.subr.mxu0 0.0
  %643 = vmatpush1.msra.mxu0 %v139
  %644 = vmatprep.subr.mxu0 0.0
  %645 = vmatpush1.msra.mxu0 %v140
  %646 = vmatprep.subr.mxu0 0.0
  %647 = vmatpush1.msra.mxu0 %v141
  %648 = vmatprep.mubr.f32.mxu0 %v320
  %649 = vmatmul.mubr.f32.gmra.mrb[0].mxu0 %v316
  %v650 = vpop.f32.mrb[0].mxu0
  %v651 = vadd.f32 %v581, %v650
  %v652 = vpop.f32.mrb[0].mxu0
  %653 = vdwg.mxu0
  %654 = vmatprep.subr.mxu0 0.0
  %655 = vmatpush1.msra.mxu0 %v142
  %656 = vmatprep.subr.mxu0 0.0
  %657 = vmatpush1.msra.mxu0 %v143
  %658 = vmatprep.subr.mxu0 0.0
  %659 = vmatpush1.msra.mxu0 %v144
  %660 = vmatprep.subr.mxu0 0.0
  %661 = vmatpush1.msra.mxu0 %v145
  %662 = vmatprep.subr.mxu0 0.0
  %663 = vmatpush1.msra.mxu0 %v146
  %664 = vmatprep.subr.mxu0 0.0
  %665 = vmatpush1.msra.mxu0 %v147
  %666 = vmatprep.subr.mxu0 0.0
  %667 = vmatpush1.msra.mxu0 %v148
  %668 = vmatprep.subr.mxu0 0.0
  %669 = vmatpush1.msra.mxu0 %v149
  %670 = vmatprep.subr.mxu0 0.0
  %671 = vmatpush1.msra.mxu0 %v150
  %672 = vmatprep.subr.mxu0 0.0
  %673 = vmatpush1.msra.mxu0 %v151
  %674 = vmatprep.subr.mxu0 0.0
  %675 = vmatpush1.msra.mxu0 %v152
  %676 = vmatprep.subr.mxu0 0.0
  %677 = vmatpush1.msra.mxu0 %v153
  %678 = vmatprep.subr.mxu0 0.0
  %679 = vmatpush1.msra.mxu0 %v154
  %680 = vmatprep.subr.mxu0 0.0
  %681 = vmatpush1.msra.mxu0 %v155
  %682 = vmatprep.subr.mxu0 0.0
  %683 = vmatpush1.msra.mxu0 %v156
  %684 = vmatprep.subr.mxu0 0.0
  %685 = vmatpush1.msra.mxu0 %v157
  %686 = vmatprep.subr.mxu0 0.0
  %687 = vmatpush1.msra.mxu0 %v158
  %688 = vmatprep.subr.mxu0 0.0
  %689 = vmatpush1.msra.mxu0 %v159
  %690 = vmatprep.subr.mxu0 0.0
  %691 = vmatpush1.msra.mxu0 %v160
  %692 = vmatprep.subr.mxu0 0.0
  %693 = vmatpush1.msra.mxu0 %v161
  %694 = vmatprep.subr.mxu0 0.0
  %695 = vmatpush1.msra.mxu0 %v162
  %696 = vmatprep.subr.mxu0 0.0
  %697 = vmatpush1.msra.mxu0 %v163
  %698 = vmatprep.subr.mxu0 0.0
  %699 = vmatpush1.msra.mxu0 %v164
  %700 = vmatprep.subr.mxu0 0.0
  %701 = vmatpush1.msra.mxu0 %v165
  %702 = vmatprep.subr.mxu0 0.0
  %703 = vmatpush1.msra.mxu0 %v166
  %704 = vmatprep.subr.mxu0 0.0
  %705 = vmatpush1.msra.mxu0 %v167
  %706 = vmatprep.subr.mxu0 0.0
  %707 = vmatpush1.msra.mxu0 %v168
  %708 = vmatprep.subr.mxu0 0.0
  %709 = vmatpush1.msra.mxu0 %v169
  %710 = vmatprep.subr.mxu0 0.0
  %711 = vmatpush1.msra.mxu0 %v170
  %712 = vmatprep.subr.mxu0 0.0
  %713 = vmatpush1.msra.mxu0 %v171
  %714 = vmatprep.subr.mxu0 0.0
  %715 = vmatpush1.msra.mxu0 %v172
  %716 = vmatprep.subr.mxu0 0.0
  %717 = vmatpush1.msra.mxu0 %v173
  %718 = vmatprep.mubr.f32.mxu0 %v328
  %719 = vmatmul.mubr.f32.gmra.mrb[0].mxu0 %v324
  %v720 = vpop.f32.mrb[0].mxu0
  %v721 = vadd.f32 %v651, %v720
  %v722 = vpop.f32.mrb[0].mxu0
  %723 = vdwg.mxu0
  %724 = vmatprep.subr.mxu0 0.0
  %725 = vmatpush1.msra.mxu0 %v174
  %726 = vmatprep.subr.mxu0 0.0
  %727 = vmatpush1.msra.mxu0 %v175
  %728 = vmatprep.subr.mxu0 0.0
  %729 = vmatpush1.msra.mxu0 %v176
  %730 = vmatprep.subr.mxu0 0.0
  %731 = vmatpush1.msra.mxu0 %v177
  %732 = vmatprep.subr.mxu0 0.0
  %733 = vmatpush1.msra.mxu0 %v178
  %734 = vmatprep.subr.mxu0 0.0
  %735 = vmatpush1.msra.mxu0 %v179
  %736 = vmatprep.subr.mxu0 0.0
  %737 = vmatpush1.msra.mxu0 %v180
  %738 = vmatprep.subr.mxu0 0.0
  %739 = vmatpush1.msra.mxu0 %v181
  %740 = vmatprep.subr.mxu0 0.0
  %741 = vmatpush1.msra.mxu0 %v182
  %742 = vmatprep.subr.mxu0 0.0
  %743 = vmatpush1.msra.mxu0 %v183
  %744 = vmatprep.subr.mxu0 0.0
  %745 = vmatpush1.msra.mxu0 %v184
  %746 = vmatprep.subr.mxu0 0.0
  %747 = vmatpush1.msra.mxu0 %v185
  %748 = vmatprep.subr.mxu0 0.0
  %749 = vmatpush1.msra.mxu0 %v186
  %750 = vmatprep.subr.mxu0 0.0
  %751 = vmatpush1.msra.mxu0 %v187
  %752 = vmatprep.subr.mxu0 0.0
  %753 = vmatpush1.msra.mxu0 %v188
  %754 = vmatprep.subr.mxu0 0.0
  %755 = vmatpush1.msra.mxu0 %v189
  %756 = vmatprep.subr.mxu0 0.0
  %757 = vmatpush1.msra.mxu0 %v190
  %758 = vmatprep.subr.mxu0 0.0
  %759 = vmatpush1.msra.mxu0 %v191
  %760 = vmatprep.subr.mxu0 0.0
  %761 = vmatpush1.msra.mxu0 %v192
  %762 = vmatprep.subr.mxu0 0.0
  %763 = vmatpush1.msra.mxu0 %v193
  %764 = vmatprep.subr.mxu0 0.0
  %765 = vmatpush1.msra.mxu0 %v194
  %766 = vmatprep.subr.mxu0 0.0
  %767 = vmatpush1.msra.mxu0 %v195
  %768 = vmatprep.subr.mxu0 0.0
  %769 = vmatpush1.msra.mxu0 %v196
  %770 = vmatprep.subr.mxu0 0.0
  %771 = vmatpush1.msra.mxu0 %v197
  %772 = vmatprep.subr.mxu0 0.0
  %773 = vmatpush1.msra.mxu0 %v198
  %774 = vmatprep.subr.mxu0 0.0
  %775 = vmatpush1.msra.mxu0 %v199
  %776 = vmatprep.subr.mxu0 0.0
  %777 = vmatpush1.msra.mxu0 %v200
  %778 = vmatprep.subr.mxu0 0.0
  %779 = vmatpush1.msra.mxu0 %v201
  %780 = vmatprep.subr.mxu0 0.0
  %781 = vmatpush1.msra.mxu0 %v202
  %782 = vmatprep.subr.mxu0 0.0
  %783 = vmatpush1.msra.mxu0 %v203
  %784 = vmatprep.subr.mxu0 0.0
  %785 = vmatpush1.msra.mxu0 %v204
  %786 = vmatprep.subr.mxu0 0.0
  %787 = vmatpush1.msra.mxu0 %v205
  %788 = vmatprep.mubr.f32.mxu0 %v336
  %789 = vmatmul.mubr.f32.gmra.mrb[0].mxu0 %v332
  %v790 = vpop.f32.mrb[0].mxu0
  %v791 = vadd.f32 %v721, %v790
  %v792 = vpop.f32.mrb[0].mxu0
  %793 = vdwg.mxu0
  %794 = vmatprep.subr.mxu0 0.0
  %795 = vmatpush1.msra.mxu0 %v206
  %796 = vmatprep.subr.mxu0 0.0
  %797 = vmatpush1.msra.mxu0 %v207
  %798 = vmatprep.subr.mxu0 0.0
  %799 = vmatpush1.msra.mxu0 %v208
  %800 = vmatprep.subr.mxu0 0.0
  %801 = vmatpush1.msra.mxu0 %v209
  %802 = vmatprep.subr.mxu0 0.0
  %803 = vmatpush1.msra.mxu0 %v210
  %804 = vmatprep.subr.mxu0 0.0
  %805 = vmatpush1.msra.mxu0 %v211
  %806 = vmatprep.subr.mxu0 0.0
  %807 = vmatpush1.msra.mxu0 %v212
  %808 = vmatprep.subr.mxu0 0.0
  %809 = vmatpush1.msra.mxu0 %v213
  %810 = vmatprep.subr.mxu0 0.0
  %811 = vmatpush1.msra.mxu0 %v214
  %812 = vmatprep.subr.mxu0 0.0
  %813 = vmatpush1.msra.mxu0 %v215
  %814 = vmatprep.subr.mxu0 0.0
  %815 = vmatpush1.msra.mxu0 %v216
  %816 = vmatprep.subr.mxu0 0.0
  %817 = vmatpush1.msra.mxu0 %v217
  %818 = vmatprep.subr.mxu0 0.0
  %819 = vmatpush1.msra.mxu0 %v218
  %820 = vmatprep.subr.mxu0 0.0
  %821 = vmatpush1.msra.mxu0 %v219
  %822 = vmatprep.subr.mxu0 0.0
  %823 = vmatpush1.msra.mxu0 %v220
  %824 = vmatprep.subr.mxu0 0.0
  %825 = vmatpush1.msra.mxu0 %v221
  %826 = vmatprep.subr.mxu0 0.0
  %827 = vmatpush1.msra.mxu0 %v222
  %828 = vmatprep.subr.mxu0 0.0
  %829 = vmatpush1.msra.mxu0 %v223
  %830 = vmatprep.subr.mxu0 0.0
  %831 = vmatpush1.msra.mxu0 %v224
  %832 = vmatprep.subr.mxu0 0.0
  %833 = vmatpush1.msra.mxu0 %v225
  %834 = vmatprep.subr.mxu0 0.0
  %835 = vmatpush1.msra.mxu0 %v226
  %836 = vmatprep.subr.mxu0 0.0
  %837 = vmatpush1.msra.mxu0 %v227
  %838 = vmatprep.subr.mxu0 0.0
  %839 = vmatpush1.msra.mxu0 %v228
  %840 = vmatprep.subr.mxu0 0.0
  %841 = vmatpush1.msra.mxu0 %v229
  %842 = vmatprep.subr.mxu0 0.0
  %843 = vmatpush1.msra.mxu0 %v230
  %844 = vmatprep.subr.mxu0 0.0
  %845 = vmatpush1.msra.mxu0 %v231
  %846 = vmatprep.subr.mxu0 0.0
  %847 = vmatpush1.msra.mxu0 %v232
  %848 = vmatprep.subr.mxu0 0.0
  %849 = vmatpush1.msra.mxu0 %v233
  %850 = vmatprep.subr.mxu0 0.0
  %851 = vmatpush1.msra.mxu0 %v234
  %852 = vmatprep.subr.mxu0 0.0
  %853 = vmatpush1.msra.mxu0 %v235
  %854 = vmatprep.subr.mxu0 0.0
  %855 = vmatpush1.msra.mxu0 %v236
  %856 = vmatprep.subr.mxu0 0.0
  %857 = vmatpush1.msra.mxu0 %v237
  %858 = vmatprep.mubr.f32.mxu0 %v344
  %859 = vmatmul.mubr.f32.gmra.mrb[0].mxu0 %v340
  %v860 = vpop.f32.mrb[0].mxu0
  %v861 = vadd.f32 %v791, %v860
  %v862 = vpop.f32.mrb[0].mxu0
  %863 = vdwg.mxu0
  %864 = vmatprep.subr.mxu0 0.0
  %865 = vmatpush1.msra.mxu0 %v238
  %866 = vmatprep.subr.mxu0 0.0
  %867 = vmatpush1.msra.mxu0 %v239
  %868 = vmatprep.subr.mxu0 0.0
  %869 = vmatpush1.msra.mxu0 %v240
  %870 = vmatprep.subr.mxu0 0.0
  %871 = vmatpush1.msra.mxu0 %v241
  %872 = vmatprep.subr.mxu0 0.0
  %873 = vmatpush1.msra.mxu0 %v242
  %874 = vmatprep.subr.mxu0 0.0
  %875 = vmatpush1.msra.mxu0 %v243
  %876 = vmatprep.subr.mxu0 0.0
  %877 = vmatpush1.msra.mxu0 %v244
  %878 = vmatprep.subr.mxu0 0.0
  %879 = vmatpush1.msra.mxu0 %v245
  %880 = vmatprep.subr.mxu0 0.0
  %881 = vmatpush1.msra.mxu0 %v246
  %882 = vmatprep.subr.mxu0 0.0
  %883 = vmatpush1.msra.mxu0 %v247
  %884 = vmatprep.subr.mxu0 0.0
  %885 = vmatpush1.msra.mxu0 %v248
  %886 = vmatprep.subr.mxu0 0.0
  %887 = vmatpush1.msra.mxu0 %v249
  %888 = vmatprep.subr.mxu0 0.0
  %889 = vmatpush1.msra.mxu0 %v250
  %890 = vmatprep.subr.mxu0 0.0
  %891 = vmatpush1.msra.mxu0 %v251
  %892 = vmatprep.subr.mxu0 0.0
  %893 = vmatpush1.msra.mxu0 %v252
  %894 = vmatprep.subr.mxu0 0.0
  %895 = vmatpush1.msra.mxu0 %v253
  %896 = vmatprep.subr.mxu0 0.0
  %897 = vmatpush1.msra.mxu0 %v254
  %898 = vmatprep.subr.mxu0 0.0
  %899 = vmatpush1.msra.mxu0 %v255
  %900 = vmatprep.subr.mxu0 0.0
  %901 = vmatpush1.msra.mxu0 %v256
  %902 = vmatprep.subr.mxu0 0.0
  %903 = vmatpush1.msra.mxu0 %v257
  %904 = vmatprep.subr.mxu0 0.0
  %905 = vmatpush1.msra.mxu0 %v258
  %906 = vmatprep.subr.mxu0 0.0
  %907 = vmatpush1.msra.mxu0 %v259
  %908 = vmatprep.subr.mxu0 0.0
  %909 = vmatpush1.msra.mxu0 %v260
  %910 = vmatprep.subr.mxu0 0.0
  %911 = vmatpush1.msra.mxu0 %v261
  %912 = vmatprep.subr.mxu0 0.0
  %913 = vmatpush1.msra.mxu0 %v262
  %914 = vmatprep.subr.mxu0 0.0
  %915 = vmatpush1.msra.mxu0 %v263
  %916 = vmatprep.subr.mxu0 0.0
  %917 = vmatpush1.msra.mxu0 %v264
  %918 = vmatprep.subr.mxu0 0.0
  %919 = vmatpush1.msra.mxu0 %v265
  %920 = vmatprep.subr.mxu0 0.0
  %921 = vmatpush1.msra.mxu0 %v266
  %922 = vmatprep.subr.mxu0 0.0
  %923 = vmatpush1.msra.mxu0 %v267
  %924 = vmatprep.subr.mxu0 0.0
  %925 = vmatpush1.msra.mxu0 %v268
  %926 = vmatprep.subr.mxu0 0.0
  %927 = vmatpush1.msra.mxu0 %v269
  %928 = vmatprep.mubr.f32.mxu0 %v352
  %929 = vmatmul.mubr.f32.gmra.mrb[0].mxu0 %v348
  %v930 = vpop.f32.mrb[0].mxu0
  %v931 = vadd.f32 %v861, %v930
  %v932 = vpop.f32.mrb[0].mxu0
  %933 = vdwg.mxu0
  %934 = vmatprep.subr.mxu0 0.0
  %935 = vmatpush1.msra.mxu0 %v270
  %936 = vmatprep.subr.mxu0 0.0
  %937 = vmatpush1.msra.mxu0 %v271
  %938 = vmatprep.subr.mxu0 0.0
  %939 = vmatpush1.msra.mxu0 %v272
  %940 = vmatprep.subr.mxu0 0.0
  %941 = vmatpush1.msra.mxu0 %v273
  %942 = vmatprep.subr.mxu0 0.0
  %943 = vmatpush1.msra.mxu0 %v274
  %944 = vmatprep.subr.mxu0 0.0
  %945 = vmatpush1.msra.mxu0 %v275
  %946 = vmatprep.subr.mxu0 0.0
  %947 = vmatpush1.msra.mxu0 %v276
  %948 = vmatprep.subr.mxu0 0.0
  %949 = vmatpush1.msra.mxu0 %v277
  %950 = vmatprep.subr.mxu0 0.0
  %951 = vmatpush1.msra.mxu0 %v278
  %952 = vmatprep.subr.mxu0 0.0
  %953 = vmatpush1.msra.mxu0 %v279
  %954 = vmatprep.subr.mxu0 0.0
  %955 = vmatpush1.msra.mxu0 %v280
  %956 = vmatprep.subr.mxu0 0.0
  %957 = vmatpush1.msra.mxu0 %v281
  %958 = vmatprep.subr.mxu0 0.0
  %959 = vmatpush1.msra.mxu0 %v282
  %960 = vmatprep.subr.mxu0 0.0
  %961 = vmatpush1.msra.mxu0 %v283
  %962 = vmatprep.subr.mxu0 0.0
  %963 = vmatpush1.msra.mxu0 %v284
  %964 = vmatprep.subr.mxu0 0.0
  %965 = vmatpush1.msra.mxu0 %v285
  %966 = vmatprep.subr.mxu0 0.0
  %967 = vmatpush1.msra.mxu0 0.0
  %968 = vmatprep.subr.mxu0 0.0
  %969 = vmatpush1.msra.mxu0 0.0
  %970 = vmatprep.subr.mxu0 0.0
  %971 = vmatpush1.msra.mxu0 0.0
  %972 = vmatprep.subr.mxu0 0.0
  %973 = vmatpush1.msra.mxu0 0.0
  %974 = vmatprep.subr.mxu0 0.0
  %975 = vmatpush1.msra.mxu0 0.0
  %976 = vmatprep.subr.mxu0 0.0
  %977 = vmatpush1.msra.mxu0 0.0
  %978 = vmatprep.subr.mxu0 0.0
  %979 = vmatpush1.msra.mxu0 0.0
  %980 = vmatprep.subr.mxu0 0.0
  %981 = vmatpush1.msra.mxu0 0.0
  %982 = vmatprep.subr.mxu0 0.0
  %983 = vmatpush1.msra.mxu0 0.0
  %984 = vmatprep.subr.mxu0 0.0
  %985 = vmatpush1.msra.mxu0 0.0
  %986 = vmatprep.subr.mxu0 0.0
  %987 = vmatpush1.msra.mxu0 0.0
  %988 = vmatprep.subr.mxu0 0.0
  %989 = vmatpush1.msra.mxu0 0.0
  %990 = vmatprep.subr.mxu0 0.0
  %991 = vmatpush1.msra.mxu0 0.0
  %992 = vmatprep.subr.mxu0 0.0
  %993 = vmatpush1.msra.mxu0 0.0
  %994 = vmatprep.subr.mxu0 0.0
  %995 = vmatpush1.msra.mxu0 0.0
  %996 = vmatprep.subr.mxu0 0.0
  %997 = vmatpush1.msra.mxu0 0.0
  %998 = vmatprep.mubr.f32.mxu0 0.0
  %999 = vmatmul.mubr.f32.gmra.mrb[0].mxu0 %v356
  %v1000 = vpop.f32.mrb[0].mxu0
  %v1001 = vadd.f32 %v931, %v1000
  %v1002 = vpop.f32.mrb[0].mxu0
  %1003 = vdwg.mxu0
  %1004 = vst [vmem:[%s2] sm:$0x1] %v1001
  // Predicated region
  $region10: #{fuse_head_forward.1} parent=0 // pred_check
    _
  $region11: #{fuse_head_forward.1} parent=0 // pred_check_branch
    %1006 = sbr.rel (0) target = $region13
  $region12: #{fuse_head_forward.1} parent=0 // pred_region
    _
  $region13: #{fuse_head_forward.1} parent=0 // pred_fallthru
    _
  // Predicated region
  $region14: #{fuse_head_forward.1} parent=0 // pred_check
    _
  $region15: #{fuse_head_forward.1} parent=0 // pred_check_branch
    %1008 = sbr.rel (0) target = $region17
  $region16: #{fuse_head_forward.1} parent=0 // pred_region
    _
  $region17: #{fuse_head_forward.1} parent=0 // pred_fallthru
    _

</llo_original>
